<compile_context>
chip_gen: v7x
topology: tpu7x:2x2x1
jax: 0.10.0
libtpu: 0.0.40
codegen_flags: <defaults>
</compile_context>

<pallas_src>
import functools
import math

import jax
import jax.numpy as jnp
import numpy as np
from jax import lax
from jax.experimental import pallas as pl
from jax.experimental.pallas import tpu as pltpu

_VMEM_LIMIT = 48 * 1024 * 1024    # Mosaic scoped-VMEM ceiling (safe on 64 MiB v7x)
_TILE_BUDGET = 36 * 1024 * 1024   # what the tile planner may spend on buffers
_NEG_BIG = -1e30                  # additive mask value for padded KV columns (finite!)

_DN_LAST = (((1,), (1,)), ((), ()))  # contract last dim of LHS with last dim of RHS
_DN_PV = (((1,), (0,)), ((), ()))    # standard (M,K)x(K,N) contraction


# ------------------------------ tiling helpers ------------------------------

def _round_up(x, m):
    return ((x + m - 1) // m) * m


def _cdiv(a, b):
    return -(-a // b)


def _tile(dim, target, align):
    """A tile size that is a multiple of `align`, close to `target`, and keeps
    padding (round_up(dim, tile) - dim) small."""
    dim_a = _round_up(dim, align)
    if dim_a <= target:
        return dim_a
    n = _cdiv(dim_a, target)
    return _round_up(_cdiv(dim, n), align)


def _linear_tiles(M, K, O, n_streams, *, tm=512, to=1024, budget=_TILE_BUDGET):
    """Pick (bm, bk, bo) so that double-buffered bf16 inputs + f32 accumulators
    + double-buffered bf16 output fit inside `budget` bytes of VMEM."""
    bm = _tile(M, tm, 16)           # 16-aligned rows (bf16 sublane packing)
    bo = _tile(O, to, 128)          # lane-dense output tiles
    acc_b = n_streams * bm * bo * 4
    out_b = 2 * bm * bo * 2
    per_k = 2 * bm * 2 + n_streams * 2 * bo * 2   # bytes per K element (x + weights, x2 buffers)
    bk_cap = max(128, int((budget - acc_b - out_b) // per_k))
    bk = _tile(K, bk_cap, 128)      # full K when it fits the budget
    return bm, bk, bo


def _pad2(x, rows, cols):
    r, c = x.shape
    if r == rows and c == cols:
        return x
    return jnp.pad(x, ((0, rows - r), (0, cols - c)))


def _pad_axis(x, axis, new_size, value=0.0):
    if x.shape[axis] == new_size:
        return x
    pads = [(0, 0)] * x.ndim
    pads[axis] = (0, new_size - x.shape[axis])
    return jnp.pad(x, pads, constant_values=value)


# ----------------------------- Pallas kernels -------------------------------

def _matmul_kernel(x_ref, w_ref, o_ref, acc_ref):
    # o = x @ w.T with w kept in torch [O, K] layout; K is grid axis 2
    # (reduction), accumulated in f32 scratch, stored as bf16.
    @pl.when(pl.program_id(2) == 0)
    def _():
        acc_ref[...] = jnp.zeros_like(acc_ref)

    acc_ref[...] += lax.dot_general(
        x_ref[...], w_ref[...], _DN_LAST, preferred_element_type=jnp.float32)

    @pl.when(pl.program_id(2) == pl.num_programs(2) - 1)
    def _():
        o_ref[...] = acc_ref[...].astype(o_ref.dtype)


def _gated_mlp_kernel(x_ref, wg_ref, wu_ref, o_ref, gacc_ref, uacc_ref):
    # Fused gate/up matmuls with K-axis accumulation; SiLU gating applied on
    # the final K step only.
    @pl.when(pl.program_id(2) == 0)
    def _():
        gacc_ref[...] = jnp.zeros_like(gacc_ref)
        uacc_ref[...] = jnp.zeros_like(uacc_ref)

    x = x_ref[...]
    gacc_ref[...] += lax.dot_general(x, wg_ref[...], _DN_LAST,
                                     preferred_element_type=jnp.float32)
    uacc_ref[...] += lax.dot_general(x, wu_ref[...], _DN_LAST,
                                     preferred_element_type=jnp.float32)

    @pl.when(pl.program_id(2) == pl.num_programs(2) - 1)
    def _():
        gate = gacc_ref[...]
        o_ref[...] = (gate * jax.nn.sigmoid(gate) * uacc_ref[...]).astype(o_ref.dtype)


def _flash_attn_kernel(q_ref, k_ref, v_ref, mask_ref, o_ref,
                       m_sc, l_sc, acc_sc, *, sm_scale, g, tq, tkv, causal):
    # One (batch, kv-head, q-tile) accumulator holding all g query heads of
    # the GQA group, streamed over KV tiles (grid axis 3, "arbitrary").
    qi = pl.program_id(2)
    kv = pl.program_id(3)
    D = q_ref.shape[-1]

    @pl.when(kv == 0)
    def _():
        m_sc[...] = jnp.full_like(m_sc, -jnp.inf)
        l_sc[...] = jnp.zeros_like(l_sc)
        acc_sc[...] = jnp.zeros_like(acc_sc)

    def _step():
        if g == 1:
            q = q_ref[0, 0]                           # [tq, D] bf16
        else:
            # (g, tq, D) -> (g*tq, D): contiguous collapse (tq % 8 == 0), free.
            q = q_ref[0].reshape(g * tq, D)
        k = k_ref[0, 0]                               # [tkv, D] bf16
        v = v_ref[0, 0]                               # [tkv, D] bf16
        s = lax.dot_general(q, k, _DN_LAST,
                            preferred_element_type=jnp.float32) * sm_scale
        m = mask_ref[0, 0].astype(jnp.float32)        # [tq, tkv]
        if g == 1:
            s = s + m
        else:
            s = (s.reshape(g, tq, tkv) + m[None, :, :]).reshape(g * tq, tkv)
        # Reference clamp: keeps -inf masks NaN-free in the online softmax.
        s = jnp.maximum(s, jnp.finfo(jnp.float32).min)

        m_prev = m_sc[...]
        m_new = jnp.maximum(m_prev, jnp.max(s, axis=-1, keepdims=True))
        a = jnp.exp(m_prev - m_new)
        p = jnp.exp(s - m_new)
        l_sc[...] = a * l_sc[...] + jnp.sum(p, axis=-1, keepdims=True)
        acc_sc[...] = a * acc_sc[...] + lax.dot_general(
            p.astype(v.dtype), v, _DN_PV, preferred_element_type=jnp.float32)
        m_sc[...] = m_new

    if causal:
        # Skip KV tiles strictly in the future of every query row of this q
        # tile -- they are fully masked by a causal mask, so they contribute 0.
        # TODO(synk): the scalar-prefetch variant would also skip the K/V DMA.
        @pl.when(kv * tkv <= qi * tq + (tq - 1))
        def _():
            _step()
    else:
        _step()

    @pl.when(kv == pl.num_programs(3) - 1)
    def _():
        inv_l = pl.reciprocal(l_sc[...], approx=True)   # EUP slot, [g*tq, 1] only
        res = (acc_sc[...] * inv_l).astype(o_ref.dtype)
        if g == 1:
            o_ref[0, 0] = res
        else:
            o_ref[0] = res.reshape(g, tq, D)


# ------------------------------ kernel wrappers ------------------------------

def prep_matmul_weight(weight, M):
    """Cast to bf16 and pad once; reused across the whole range search."""
    O, K = weight.shape
    bm, bk, bo = _linear_tiles(M, K, O, 1)
    wb = _pad2(weight.astype(jnp.bfloat16), _round_up(O, bo), _round_up(K, bk))
    return {'wb': wb, 'bm': bm, 'bk': bk, 'bo': bo, 'O': O, 'K': K}


def matmul_xwT(x2d, weight=None, prep=None):
    """x2d: [M, K], weight: [O, K] (torch layout) -> [M, O] bf16 = x @ W.T."""
    M, K = x2d.shape
    if prep is None:
        prep = prep_matmul_weight(weight, M)
    bm, bk, bo, O = prep['bm'], prep['bk'], prep['bo'], prep['O']
    wb = prep['wb']
    Op, Kp = wb.shape
    Mp = _round_up(M, bm)
    xb = _pad2(x2d.astype(jnp.bfloat16), Mp, Kp)
    out = pl.pallas_call(
        _matmul_kernel,
        out_shape=jax.ShapeDtypeStruct((Mp, Op), jnp.bfloat16),
        grid_spec=pltpu.PrefetchScalarGridSpec(
            num_scalar_prefetch=0,
            grid=(Mp // bm, Op // bo, Kp // bk),
            in_specs=[pl.BlockSpec((bm, bk), lambda i, j, k: (i, k)),
                      pl.BlockSpec((bo, bk), lambda i, j, k: (j, k))],
            out_specs=pl.BlockSpec((bm, bo), lambda i, j, k: (i, j)),
            scratch_shapes=[pltpu.VMEM((bm, bo), jnp.float32)],
        ),
        compiler_params=pltpu.CompilerParams(
            dimension_semantics=("parallel", "parallel", "arbitrary"),
            vmem_limit_bytes=_VMEM_LIMIT),
    )(xb, wb)
    return out[:M, :O]


def prep_gated_weight(weight, M):
    O, K = weight.shape
    half = O // 2
    bm, bk, bo = _linear_tiles(M, K, half, 2)
    Op, Kp = _round_up(half, bo), _round_up(K, bk)
    wgb = _pad2(weight[:half].astype(jnp.bfloat16), Op, Kp)
    wub = _pad2(weight[half:].astype(jnp.bfloat16), Op, Kp)
    return {'wgb': wgb, 'wub': wub, 'bm': bm, 'bk': bk, 'bo': bo,
            'half': half, 'K': K}


def gated_mlp(x2d, weight=None, prep=None):
    """y = x @ W.T split as [gate | up] along the output dim -> silu(gate)*up."""
    M, K = x2d.shape
    if prep is None:
        prep = prep_gated_weight(weight, M)
    bm, bk, bo, half = prep['bm'], prep['bk'], prep['bo'], prep['half']
    wgb, wub = prep['wgb'], prep['wub']
    Op, Kp = wgb.shape
    Mp = _round_up(M, bm)
    xb = _pad2(x2d.astype(jnp.bfloat16), Mp, Kp)
    out = pl.pallas_call(
        _gated_mlp_kernel,
        out_shape=jax.ShapeDtypeStruct((Mp, Op), jnp.bfloat16),
        grid_spec=pltpu.PrefetchScalarGridSpec(
            num_scalar_prefetch=0,
            grid=(Mp // bm, Op // bo, Kp // bk),
            in_specs=[pl.BlockSpec((bm, bk), lambda i, j, k: (i, k)),
                      pl.BlockSpec((bo, bk), lambda i, j, k: (j, k)),
                      pl.BlockSpec((bo, bk), lambda i, j, k: (j, k))],
            out_specs=pl.BlockSpec((bm, bo), lambda i, j, k: (i, j)),
            scratch_shapes=[pltpu.VMEM((bm, bo), jnp.float32),
                            pltpu.VMEM((bm, bo), jnp.float32)],
        ),
        compiler_params=pltpu.CompilerParams(
            dimension_semantics=("parallel", "parallel", "arbitrary"),
            vmem_limit_bytes=_VMEM_LIMIT),
    )(xb, wgb, wub)
    return out[:M, :half]


def prep_attention_mask(mask, N, *, tq_target=512, tkv_target=512):
    """bf16 cast + pad of the additive [B,1,N,N] mask, done once per migrator."""
    tq = _tile(N, tq_target, 16)
    tkv = _tile(N, tkv_target, 128)
    Nq, Nkv = _round_up(N, tq), _round_up(N, tkv)
    mb = mask.astype(jnp.bfloat16)
    if Nq != N or Nkv != N:
        mb = jnp.pad(mb, ((0, 0), (0, 0), (0, Nq - N), (0, Nkv - N)),
                     constant_values=_NEG_BIG)
    return {'mb': mb, 'tq': tq, 'tkv': tkv, 'Nq': Nq, 'Nkv': Nkv}


def attention(q_rot, k_rot, v, num_key_value_groups, prep, *, causal=False):
    """q_rot:[B,H,N,D], k_rot/v:[B,Hkv,N,D] -> [B,H,N,D] bf16 (GQA flash attn)."""
    B, H, N, D = q_rot.shape
    Hkv = k_rot.shape[1]
    g = num_key_value_groups
    assert H == Hkv * g
    tq, tkv, Nq, Nkv = prep['tq'], prep['tkv'], prep['Nq'], prep['Nkv']
    mb = prep['mb']
    qb = _pad_axis(q_rot.astype(jnp.bfloat16), 2, Nq)
    kb = _pad_axis(k_rot.astype(jnp.bfloat16), 2, Nkv)
    vb = _pad_axis(v.astype(jnp.bfloat16), 2, Nkv)

    kern = functools.partial(_flash_attn_kernel, sm_scale=1.0 / math.sqrt(D),
                             g=g, tq=tq, tkv=tkv, causal=causal)
    out = pl.pallas_call(
        kern,
        out_shape=jax.ShapeDtypeStruct((B, H, Nq, D), jnp.bfloat16),
        grid_spec=pltpu.PrefetchScalarGridSpec(
            num_scalar_prefetch=0,
            grid=(B, Hkv, Nq // tq, Nkv // tkv),
            in_specs=[
                # whole GQA group of g query heads per step
                pl.BlockSpec((1, g, tq, D), lambda b, h, qi, ki: (b, h, qi, 0)),
                pl.BlockSpec((1, 1, tkv, D), lambda b, h, qi, ki: (b, h, ki, 0)),
                pl.BlockSpec((1, 1, tkv, D), lambda b, h, qi, ki: (b, h, ki, 0)),
                pl.BlockSpec((1, 1, tq, tkv), lambda b, h, qi, ki: (b, 0, qi, ki)),
            ],
            out_specs=pl.BlockSpec((1, g, tq, D), lambda b, h, qi, ki: (b, h, qi, 0)),
            scratch_shapes=[pltpu.VMEM((g * tq, 1), jnp.float32),
                            pltpu.VMEM((g * tq, 1), jnp.float32),
                            pltpu.VMEM((g * tq, D), jnp.float32)],
        ),
        compiler_params=pltpu.CompilerParams(
            dimension_semantics=("parallel", "parallel", "parallel", "arbitrary"),
            vmem_limit_bytes=_VMEM_LIMIT),
    )(qb, kb, vb, mb)
    return out[:, :, :N, :]


# ------------------------------- glue (JAX) ---------------------------------

def rotate_half(x):
    d = x.shape[-1]
    return jnp.concatenate([-x[..., d // 2:], x[..., :d // 2]], axis=-1)


def apply_rotary(q, k, cos_cached, sin_cached, position_ids):
    # TODO(synk): fusing rotary into the flash kernel (pltpu.roll on the idle
    # XLU slot) would remove one activation round trip; kept in XLA glue here.
    cos = cos_cached[position_ids]    # [N, D]
    sin = sin_cached[position_ids]    # [N, D]
    q_rot = q * cos + rotate_half(q) * sin
    k_rot = k * cos + rotate_half(k) * sin
    return q_rot, k_rot


class MigratorBase:
    """JAX/Pallas port of quant_transformer MigratorBase forward-path compute."""

    def __init__(self, inp, weight, module_type, extra_dict=None):
        self.input = inp
        self.weight = weight
        self.module_type = module_type
        self.extra_dict = extra_dict or {}

        # hoisted / cached weight + mask prep (the 1-D range search re-runs
        # the forward >= 100 times; never re-cast the weight per call)
        B, N = inp.shape[0], inp.shape[1]
        M = B * N
        if module_type == 'up_and_gate':
            self._wprep = prep_gated_weight(weight, M)
        else:
            self._wprep = prep_matmul_weight(weight, M)
        self._attn_prep = None
        if module_type == 'qkv':
            self._attn_prep = prep_attention_mask(
                self.extra_dict['attention_mask'], N)

        # per-channel / global activation stats (init-time reductions, glue)
        self.cmx = inp.max(axis=0).max(axis=0)
        self.cmn = inp.min(axis=0).min(axis=0)
        self.amx = jnp.maximum(inp.max(), 0.0)
        self.amn = jnp.minimum(inp.min(), 0.0)
        self.output = self.get_output(inp, weight)
        # TODO(synk): MinMaxObserver / fake-quant calibration path (quantize,
        # get_qoutput, cac_loss) is host-side search logic, not the forward
        # hot path; omitted here.

    # --- dispatch ------------------------------------------------------
    def get_output(self, inp, weight):
        if self.module_type == 'qkv':
            return self.qkv_function(inp, weight)
        elif self.module_type == 'up_and_gate':
            return self.up_function(inp, weight)
        elif self.module_type == 'down_proj':
            return self.down_function(inp, weight)
        raise NotImplementedError(self.module_type)

    # --- module-type forward paths (hot path in Pallas) ----------------
    def qkv_function(self, x, w):
        B, N, C = x.shape
        ed = self.extra_dict
        hd, H, Hkv = ed['head_dim'], ed['num_heads'], ed['num_key_value_heads']
        prep = self._wprep if w is self.weight else prep_matmul_weight(w, B * N)
        qkv = matmul_xwT(x.reshape(B * N, C), prep=prep).reshape(B, N, -1)    # Pallas
        sz_q, sz_kv = H * hd, Hkv * hd
        q = qkv[:, :, :sz_q].reshape(B, N, H, hd).transpose(0, 2, 1, 3)
        k = qkv[:, :, sz_q:sz_q + sz_kv].reshape(B, N, Hkv, hd).transpose(0, 2, 1, 3)
        v = qkv[:, :, sz_q + sz_kv:].reshape(B, N, Hkv, hd).transpose(0, 2, 1, 3)
        q, k = apply_rotary(q, k, ed['cos_cached'], ed['sin_cached'],
                            ed['position_ids'])
        out = attention(q, k, v, ed['num_key_value_groups'], self._attn_prep,
                        causal=ed.get('is_causal', False))                    # Pallas
        out = out.transpose(0, 2, 1, 3).reshape(B, N, C)
        # TODO(synk): output[observation_mask == 1] is a data-dependent-shape
        # boolean selection; observation_mask is all-ones here, so this is a
        # full flatten.
        return out.reshape(B * N, C).astype(jnp.float32)

    def up_function(self, x, w):
        B, N, K = x.shape
        prep = self._wprep if w is self.weight else prep_gated_weight(w, B * N)
        out = gated_mlp(x.reshape(B * N, K), prep=prep)                       # Pallas
        return out.astype(jnp.float32)            # all-ones observation_mask

    def down_function(self, x, w):
        B, N, K = x.shape
        prep = self._wprep if w is self.weight else prep_matmul_weight(w, B * N)
        out = matmul_xwT(x.reshape(B * N, K), prep=prep)                      # Pallas
        return out.astype(jnp.float32)            # all-ones observation_mask

    # --- auxiliary helpers kept for API fidelity (plain JAX) -----------
    def cac_scale(self, min_range, max_range):
        mx_scale = jnp.where(self.cmx > max_range, self.cmx / max_range, 1.0)
        mn_scale = jnp.where(self.cmn < min_range, self.cmn / min_range, 1.0)
        return jnp.maximum(mx_scale, mn_scale)

    def loss_fx(self, pred, tgt, p=2.0):
        return jnp.mean(jnp.sum(jnp.abs(pred - tgt) ** p, axis=-1))

    def forward(self):
        pass


class Migrator1DRangeSearch(MigratorBase):
    """1-D migrate-range search wrapper (spec: Migrator1DRangeSearch)."""

    def __init__(self, inp, weight, module_type, extra_dict=None):
        super().__init__(inp, weight, module_type, extra_dict)
        self.num = max(100, int(float(self.amx) / 0.5))
        # TODO(synk): search_migrate_range_1D / cac_scale_loss need the
        # fake-quant observer path (host-side grid search); not ported.


# ------------------------------ references ----------------------------------

def ref_attention(q, k, v, mask, g, hd):
    k = jnp.repeat(k, g, axis=1)
    v = jnp.repeat(v, g, axis=1)
    s = (q / math.sqrt(hd)) @ jnp.swapaxes(k, -1, -2)
    s = s + mask
    s = jnp.maximum(s, jnp.finfo(jnp.float32).min)
    p = jax.nn.softmax(s, axis=-1)
    return p @ v


def ref_qkv(x, w, ed):
    B, N, C = x.shape
    hd, H, Hkv = ed['head_dim'], ed['num_heads'], ed['num_key_value_heads']
    qkv = x @ w.T
    sz_q, sz_kv = H * hd, Hkv * hd
    q = qkv[:, :, :sz_q].reshape(B, N, H, hd).transpose(0, 2, 1, 3)
    k = qkv[:, :, sz_q:sz_q + sz_kv].reshape(B, N, Hkv, hd).transpose(0, 2, 1, 3)
    v = qkv[:, :, sz_q + sz_kv:].reshape(B, N, Hkv, hd).transpose(0, 2, 1, 3)
    q, k = apply_rotary(q, k, ed['cos_cached'], ed['sin_cached'],
                        ed['position_ids'])
    out = ref_attention(q, k, v, ed['attention_mask'],
                        ed['num_key_value_groups'], hd)
    return out.transpose(0, 2, 1, 3).reshape(B * N, C)


def ref_up(x, w):
    B, N, K = x.shape
    O = w.shape[0]
    y = (x @ w.T).reshape(B, N, 2, O // 2).transpose(2, 0, 1, 3)
    gate, up = y[0], y[1]
    return (jax.nn.silu(gate) * up).reshape(B * N, O // 2)


def ref_down(x, w):
    B, N, K = x.shape
    return (x @ w.T).reshape(B * N, -1)


# --------------------------------- main --------------------------------------

if __name__ == "__main__":
    key = jax.random.PRNGKey(0)
    k1, k2, k3, k4, k5 = jax.random.split(key, 5)

    # small llama-like config
    B, N, C = 2, 8, 32
    head_dim, num_heads, num_kv_heads = 8, 4, 2
    groups = num_heads // num_kv_heads
    inter = 64
    max_seq = 16

    # deterministic synthetic tensors
    x_attn = jax.random.normal(k1, (B, N, C), dtype=jnp.float32) * 0.5
    w_qkv = jax.random.normal(k2, (num_heads * head_dim + 2 * num_kv_heads * head_dim, C),
                              dtype=jnp.float32) * 0.05
    w_up = jax.random.normal(k3, (2 * inter, C), dtype=jnp.float32) * 0.05
    x_down = jax.random.normal(k4, (B, N, inter), dtype=jnp.float32) * 0.5
    w_down = jax.random.normal(k5, (C, inter), dtype=jnp.float32) * 0.05

    # rotary caches
    pos = jnp.arange(max_seq, dtype=jnp.float32)
    inv_freq = 1.0 / (10000.0 ** (jnp.arange(0, head_dim, 2, dtype=jnp.float32) / head_dim))
    freqs = jnp.outer(pos, inv_freq)
    emb = jnp.concatenate([freqs, freqs], axis=-1)          # [max_seq, D]
    cos_cached, sin_cached = jnp.cos(emb), jnp.sin(emb)

    # causal attention mask [B, 1, N, N]
    causal = jnp.where(jnp.tril(jnp.ones((N, N), dtype=bool)), 0.0, -1e9)
    attention_mask = jnp.broadcast_to(causal, (B, 1, N, N)).astype(jnp.float32)

    extra_dict = {
        'head_dim': head_dim,
        'num_heads': num_heads,
        'num_key_value_heads': num_kv_heads,
        'num_key_value_groups': groups,
        'cos_cached': cos_cached,
        'sin_cached': sin_cached,
        'position_ids': jnp.arange(N),
        'attention_mask': attention_mask,
        'is_causal': True,       # enables future-KV-tile skipping in the kernel
        'observation_mask': jnp.ones((B, N), dtype=jnp.int32),
        'act_fn': jax.nn.silu,
    }

    # run the three module types through the Pallas-backed migrator
    mig_qkv = Migrator1DRangeSearch(x_attn, w_qkv, 'qkv', extra_dict)
    mig_up = Migrator1DRangeSearch(x_attn, w_up, 'up_and_gate', extra_dict)
    mig_down = Migrator1DRangeSearch(x_down, w_down, 'down_proj', extra_dict)

    out_qkv = jax.block_until_ready(mig_qkv.output)
    out_up = jax.block_until_ready(mig_up.output)
    out_down = jax.block_until_ready(mig_down.output)

    # pure-JAX f32 references (kernels compute on bf16 operands with f32
    # accumulation and bf16 outputs, hence the loosened tolerance)
    np.testing.assert_allclose(np.asarray(out_qkv),
                               np.asarray(ref_qkv(x_attn, w_qkv, extra_dict)),
                               rtol=2e-2, atol=2e-2)
    np.testing.assert_allclose(np.asarray(out_up),
                               np.asarray(ref_up(x_attn, w_up)),
                               rtol=2e-2, atol=2e-2)
    np.testing.assert_allclose(np.asarray(out_down),
                               np.asarray(ref_down(x_down, w_down)),
                               rtol=2e-2, atol=2e-2)

    print("KERNEL_OK")
</pallas_src>

<mosaic_0001>
module attributes {stable_mosaic.version = 11 : i64} {
  func.func @_matmul_kernel(%arg0: i32, %arg1: i32, %arg2: i32, %arg3: memref<16x128xbf16, #tpu.memory_space<vmem>>, %arg4: memref<128x128xbf16, #tpu.memory_space<vmem>>, %arg5: memref<16x128xbf16, #tpu.memory_space<vmem>>, %arg6: memref<16x128xf32, #tpu.memory_space<vmem>>) attributes {dimension_semantics = [#tpu.dimension_semantics<parallel>, #tpu.dimension_semantics<parallel>, #tpu.dimension_semantics<arbitrary>], iteration_bounds = array<i64: 1, 1, 1>, scalar_prefetch = 0 : i64, scratch_operands = 1 : i64, tpu.core_type = #tpu.core_type<tc>, window_params = [{transform_indices = @transform_0, window_bounds = array<i64: 16, 128>}, {transform_indices = @transform_1, window_bounds = array<i64: 128, 128>}, {transform_indices = @transform_2, window_bounds = array<i64: 16, 128>}]} {
    %c0_i32 = arith.constant 0 : i32
    %0 = arith.cmpi eq, %arg2, %c0_i32 : i32
    %1 = arith.extui %0 : i1 to i32
    %c0_i32_0 = arith.constant 0 : i32
    %2 = arith.cmpi ne, %1, %c0_i32_0 : i32
    scf.if %2 {
      %cst_10 = arith.constant 0.000000e+00 : f32
      %12 = vector.broadcast %cst_10 : f32 to vector<16x128xf32>
      %c0_11 = arith.constant 0 : index
      %c0_12 = arith.constant 0 : index
      %13 = vector.load %arg6[%c0_11, %c0_12] : memref<16x128xf32, #tpu.memory_space<vmem>>, vector<16x128xf32>
      tpu.vector_store %arg6[%c0_11, %c0_12], %12 {strides = array<i32>} : memref<16x128xf32, #tpu.memory_space<vmem>>, vector<16x128xf32>,
    } else {
    }
    %c0 = arith.constant 0 : index
    %c0_1 = arith.constant 0 : index
    %3 = vector.load %arg6[%c0, %c0_1] : memref<16x128xf32, #tpu.memory_space<vmem>>, vector<16x128xf32>
    %c0_2 = arith.constant 0 : index
    %c0_3 = arith.constant 0 : index
    %4 = vector.load %arg3[%c0_2, %c0_3] : memref<16x128xbf16, #tpu.memory_space<vmem>>, vector<16x128xbf16>
    %c0_4 = arith.constant 0 : index
    %c0_5 = arith.constant 0 : index
    %5 = vector.load %arg4[%c0_4, %c0_5] : memref<128x128xbf16, #tpu.memory_space<vmem>>, vector<128x128xbf16>
    %cst = arith.constant dense<0.000000e+00> : vector<16x128xf32>
    %6 = tpu.matmul %4, %5, %cst {dimension_numbers = #tpu.dot_dimension_numbers<[1], [1], [0], [0], [0, 0, 1, 0], [], []>} : vector<16x128xbf16>, vector<128x128xbf16>, vector<16x128xf32> -> vector<16x128xf32>
    %7 = arith.addf %3, %6 : vector<16x128xf32>
    %c0_6 = arith.constant 0 : index
    %c0_7 = arith.constant 0 : index
    %8 = vector.load %arg6[%c0_6, %c0_7] : memref<16x128xf32, #tpu.memory_space<vmem>>, vector<16x128xf32>
    tpu.vector_store %arg6[%c0_6, %c0_7], %7 {strides = array<i32>} : memref<16x128xf32, #tpu.memory_space<vmem>>, vector<16x128xf32>,
    %c0_i32_8 = arith.constant 0 : i32
    %9 = arith.cmpi eq, %arg2, %c0_i32_8 : i32
    %10 = arith.extui %9 : i1 to i32
    %c0_i32_9 = arith.constant 0 : i32
    %11 = arith.cmpi ne, %10, %c0_i32_9 : i32
    scf.if %11 {
      %c0_10 = arith.constant 0 : index
      %c0_11 = arith.constant 0 : index
      %12 = vector.load %arg6[%c0_10, %c0_11] : memref<16x128xf32, #tpu.memory_space<vmem>>, vector<16x128xf32>
      %13 = arith.truncf %12 : vector<16x128xf32> to vector<16x128xbf16>
      %c0_12 = arith.constant 0 : index
      %c0_13 = arith.constant 0 : index
      %14 = vector.load %arg5[%c0_12, %c0_13] : memref<16x128xbf16, #tpu.memory_space<vmem>>, vector<16x128xbf16>
      tpu.vector_store %arg5[%c0_12, %c0_13], %13 {strides = array<i32>} : memref<16x128xbf16, #tpu.memory_space<vmem>>, vector<16x128xbf16>,
    } else {
    }
    return
  }
  func.func @transform_0(%arg0: i32, %arg1: i32, %arg2: i32) -> (i32, i32) {
    %c0_i32 = arith.constant 0 : i32
    return %arg0, %arg2 : i32, i32
  }
  func.func @transform_1(%arg0: i32, %arg1: i32, %arg2: i32) -> (i32, i32) {
    %c0_i32 = arith.constant 0 : i32
    return %arg1, %arg2 : i32, i32
  }
  func.func @transform_2(%arg0: i32, %arg1: i32, %arg2: i32) -> (i32, i32) {
    %c0_i32 = arith.constant 0 : i32
    return %arg0, %arg1 : i32, i32
  }
}

</mosaic_0001>

<llo_original>
// kernel: tpu_custom_call.1
$region0: #{tpu_custom_call.1}
  #allocation0 [shape = 'u32[]', space=smem, size = 0x4, offset = 0x4, fixed_abs, tag = 'smem constant byte address 0x4 - core index']
  #allocation1 [shape = 'u32[144,128]{1,0:T(1,128)}', space=vmem, size = 0x12000, scoped, tag = 'internal scratch']
  #allocation2 [shape = 'f32[16,128]{1,0:T(8,128)}', space=vmem, size = 0x2000, scoped, tag = 'scratch operand']
  %s0 = inlined_call_operand.hbm [shape: bf16[16,128], index: 0, kind: input, shape index: {}]
  %s1 = inlined_call_operand.hbm [shape: bf16[128,128], index: 1, kind: input, shape index: {}]
  %s2 = inlined_call_operand.hbm [shape: bf16[16,128], index: 2, kind: output, shape index: {}]
  %s3 = sld [smem:[#allocation0]]
  $region34: #{tpu_custom_call.1} parent=0
    _
  %s5 = ssub.s32 1, %s3
  %s6 = scalar_select 0, %s5, %s3
  $region1: #{tpu_custom_call.1} parent=0
    #allocation3 [shape = 'u8[4096]{0}', space=vmem, size = 0x1000, scoped, tag = 'input window, operand 0, single buffered']
    #allocation4 [shape = 's32[1]{0}', space=sflag, size = 0x4, scoped, tag = 'scoped memory for tpu_custom_call.1']
    #allocation5 [shape = 's32[1]{0}', space=sflag, size = 0x4, scoped, tag = 'scoped memory for tpu_custom_call.1']
    #allocation6 [shape = 'u8[32768]{0}', space=vmem, size = 0x8000, scoped, tag = 'input window, operand 1, single buffered']
    #allocation7 [shape = 's32[1]{0}', space=sflag, size = 0x4, scoped, tag = 'scoped memory for tpu_custom_call.1']
    #allocation8 [shape = 'u8[4096]{0}', space=vmem, size = 0x1000, scoped, tag = 'output window, operand 0, single buffered']
    %7 = vsyncpa [#allocation4], 0
    %8 = vsyncpa [#allocation7], 0
    %9 = vsyncpa [#allocation5], 0
    // Predicated region
    $region2: #{tpu_custom_call.1} parent=1 // pred_check
      _
    $region3: #{tpu_custom_call.1} parent=1 // pred_check_branch
      %11 = sbr.rel (0) target = $region5
    $region4: #{tpu_custom_call.1} parent=1 // pred_region
      %s13 = ssub.s32 128, 128
      %14 = vsyncadd [#allocation4], %s13
      %s15 = sshll.u32 [#allocation3], 4
      %s16 = int_to_ptr.vmem [resolvable:$true] %s15
      %21 = dma.hbm_to_vmem [thread:$0]  %s0, 128, %s16, [#allocation4], 64, 64, 4
    $region5: #{tpu_custom_call.1} parent=1 // pred_fallthru
      _
    // Predicated region
    $region6: #{tpu_custom_call.1} parent=1 // pred_check
      _
    $region7: #{tpu_custom_call.1} parent=1 // pred_check_branch
      %23 = sbr.rel (0) target = $region9
    $region8: #{tpu_custom_call.1} parent=1 // pred_region
      %s25 = ssub.s32 1024, 1024
      %26 = vsyncadd [#allocation7], %s25
      %s27 = sshll.u32 [#allocation6], 4
      %s28 = int_to_ptr.vmem [resolvable:$true] %s27
      %33 = dma.hbm_to_vmem [thread:$0]  %s1, 1024, %s28, [#allocation7], 64, 64, 4
    $region9: #{tpu_custom_call.1} parent=1 // pred_fallthru
      _
    // Predicated region
    $region10: #{tpu_custom_call.1} parent=1 // pred_check
      _
    $region11: #{tpu_custom_call.1} parent=1 // pred_check_branch
      %35 = sbr.rel (0) target = $region13
    $region12: #{tpu_custom_call.1} parent=1 // pred_region
      %36 = dma.done [#allocation4], 128
    $region13: #{tpu_custom_call.1} parent=1 // pred_fallthru
      _
    // Predicated region
    $region14: #{tpu_custom_call.1} parent=1 // pred_check
      _
    $region15: #{tpu_custom_call.1} parent=1 // pred_check_branch
      %38 = sbr.rel (0) target = $region17
    $region16: #{tpu_custom_call.1} parent=1 // pred_region
      %39 = dma.done [#allocation7], 1024
    $region17: #{tpu_custom_call.1} parent=1 // pred_fallthru
      _
    %p41 = scmp.eq.s32.totalorder 0, 0
    // Predicated region
    $region18: #{tpu_custom_call.1} parent=1 // pred_check
      %p42 = pneg %p41
    $region19: #{tpu_custom_call.1} parent=1 // pred_check_branch
      %44 = sbr.rel (%p42) target = $region21
    $region20: #{tpu_custom_call.1} parent=1 // pred_region
      %45 = vst [vmem:[#allocation2] sm:$0xff] 0.0
      %46 = vst [vmem:[#allocation2 + $0x8] sm:$0xff] 0.0
    $region21: #{tpu_custom_call.1} parent=1 // pred_fallthru
      _
    %v47 = vld [vmem:[#allocation2] sm:$0xff]
    %v48 = vld [vmem:[#allocation2 + $0x8] sm:$0xff]
    %v49 = vld [vmem:[#allocation3] sm:$0xf]
    %v50 = vld [vmem:[#allocation3 + $0x4] sm:$0xf]
    %v51 = vld [vmem:[#allocation6] sm:$0xf]
    %v52 = vld [vmem:[#allocation6 + $0x4] sm:$0xf]
    %v53 = vld [vmem:[#allocation6 + $0x8] sm:$0xf]
    %v54 = vld [vmem:[#allocation6 + $0xc] sm:$0xf]
    %v55 = vld [vmem:[#allocation6 + $0x10] sm:$0xf]
    %v56 = vld [vmem:[#allocation6 + $0x14] sm:$0xf]
    %v57 = vld [vmem:[#allocation6 + $0x18] sm:$0xf]
    %v58 = vld [vmem:[#allocation6 + $0x1c] sm:$0xf]
    %v59 = vld [vmem:[#allocation6 + $0x20] sm:$0xf]
    %v60 = vld [vmem:[#allocation6 + $0x24] sm:$0xf]
    %v61 = vld [vmem:[#allocation6 + $0x28] sm:$0xf]
    %v62 = vld [vmem:[#allocation6 + $0x2c] sm:$0xf]
    %v63 = vld [vmem:[#allocation6 + $0x30] sm:$0xf]
    %v64 = vld [vmem:[#allocation6 + $0x34] sm:$0xf]
    %v65 = vld [vmem:[#allocation6 + $0x38] sm:$0xf]
    %v66 = vld [vmem:[#allocation6 + $0x3c] sm:$0xf]
    %v69 = vunpack.c.l.b16 %v49
    %v70 = vunpack.c.l.b16 %v50
    %v71 = vpack.c.b16 %v70, %v69
    %v89 = vunpack.c.l.b16 %v51
    %v90 = vunpack.c.l.b16 %v52
    %v91 = vunpack.c.l.b16 %v53
    %v92 = vunpack.c.l.b16 %v54
    %v93 = vunpack.c.l.b16 %v55
    %v94 = vunpack.c.l.b16 %v56
    %v95 = vunpack.c.l.b16 %v57
    %v96 = vunpack.c.l.b16 %v58
    %v97 = vunpack.c.l.b16 %v59
    %v98 = vunpack.c.l.b16 %v60
    %v99 = vunpack.c.l.b16 %v61
    %v100 = vunpack.c.l.b16 %v62
    %v101 = vunpack.c.l.b16 %v63
    %v102 = vunpack.c.l.b16 %v64
    %v103 = vunpack.c.l.b16 %v65
    %v104 = vunpack.c.l.b16 %v66
    %v105 = vpack.c.b16 %v90, %v89
    %v106 = vpack.c.b16 %v92, %v91
    %v107 = vpack.c.b16 %v94, %v93
    %v108 = vpack.c.b16 %v96, %v95
    %v109 = vpack.c.b16 %v98, %v97
    %v110 = vpack.c.b16 %v100, %v99
    %v111 = vpack.c.b16 %v102, %v101
    %v112 = vpack.c.b16 %v104, %v103
    %121 = vmatprep.subr.bf16.mxu0 0
    %122 = vmatpush1.bf16.xpose.msra.mxu0 %v105
    %123 = vmatprep.subr.bf16.mxu0 0
    %124 = vmatpush1.bf16.xpose.msra.mxu0 %v106
    %125 = vmatprep.subr.bf16.mxu0 0
    %126 = vmatpush1.bf16.xpose.msra.mxu0 %v107
    %127 = vmatprep.subr.bf16.mxu0 0
    %128 = vmatpush1.bf16.xpose.msra.mxu0 %v108
    %129 = vmatprep.subr.bf16.mxu0 0
    %130 = vmatpush1.bf16.xpose.msra.mxu0 %v109
    %131 = vmatprep.subr.bf16.mxu0 0
    %132 = vmatpush1.bf16.xpose.msra.mxu0 %v110
    %133 = vmatprep.subr.bf16.mxu0 0
    %134 = vmatpush1.bf16.xpose.msra.mxu0 %v111
    %135 = vmatprep.subr.bf16.mxu0 0
    %136 = vmatpush1.bf16.xpose.msra.mxu0 %v112
    %137 = vmatprep.subr.bf16.mxu0 0
    %138 = vmatpush1.bf16.xpose.msra.mxu0 0
    %139 = vmatprep.subr.bf16.mxu0 0
    %140 = vmatpush1.bf16.xpose.msra.mxu0 0
    %141 = vmatprep.subr.bf16.mxu0 0
    %142 = vmatpush1.bf16.xpose.msra.mxu0 0
    %143 = vmatprep.subr.bf16.mxu0 0
    %144 = vmatpush1.bf16.xpose.msra.mxu0 0
    %145 = vmatprep.subr.bf16.mxu0 0
    %146 = vmatpush1.bf16.xpose.msra.mxu0 0
    %147 = vmatprep.subr.bf16.mxu0 0
    %148 = vmatpush1.bf16.xpose.msra.mxu0 0
    %149 = vmatprep.subr.bf16.mxu0 0
    %150 = vmatpush1.bf16.xpose.msra.mxu0 0
    %151 = vmatprep.subr.bf16.mxu0 0
    %152 = vmatpush1.bf16.xpose.msra.mxu0 0
    %153 = vmatprep.mubr.bf16.mxu0 0
    %154 = vmatmul.mubr.bf16.gmra.mrb[0].mxu0 %v71
    %v155 = vpop.f32.mrb[0].mxu0
    %v156 = vadd.f32 0.0, %v155
    %v157 = vpop.f32.mrb[0].mxu0
    %v158 = vpop.f32.mrb[0].mxu0
    %v159 = vadd.f32 0.0, %v158
    %v160 = vpop.f32.mrb[0].mxu0
    %161 = vdwg.mxu0
    %v162 = vadd.f32 %v47, %v156
    %v163 = vadd.f32 %v48, %v159
    %164 = vst [vmem:[#allocation2] sm:$0xff] %v162
    %165 = vst [vmem:[#allocation2 + $0x8] sm:$0xff] %v163
    // Predicated region
    $region22: #{tpu_custom_call.1} parent=1 // pred_check
      %p166 = pneg %p41
    $region23: #{tpu_custom_call.1} parent=1 // pred_check_branch
      %168 = sbr.rel (%p166) target = $region25
    $region24: #{tpu_custom_call.1} parent=1 // pred_region
      %v169 = vld [vmem:[#allocation2] sm:$0xff]
      %v170 = vld [vmem:[#allocation2 + $0x8] sm:$0xff]
      %v171 = vpack.c.bf16 %v170, %v169
      %v173 = vunpack.c.l.b16 %v171
      %v174 = vunpack.c.h.b16 %v171
      %v175 = vpack.c.b16 %v173, %v173
      %v176 = vpack.c.b16 %v174, %v174
      %179 = vst [vmem:[#allocation8] sm:$0xf] %v175
      %180 = vst [vmem:[#allocation8 + $0x4] sm:$0xf] %v176
    $region25: #{tpu_custom_call.1} parent=1 // pred_fallthru
      _
    // Predicated region
    $region26: #{tpu_custom_call.1} parent=1 // pred_check
      _
    $region27: #{tpu_custom_call.1} parent=1 // pred_check_branch
      %182 = sbr.rel (0) target = $region29
    $region28: #{tpu_custom_call.1} parent=1 // pred_region
      %s184 = ssub.s32 128, 128
      %185 = vsyncadd [#allocation5], %s184
      %s186 = sshll.u32 [#allocation8], 4
      %s187 = int_to_ptr.vmem [resolvable:$true] %s186
      %192 = dma.vmem_to_hbm [thread:$0]  %s187, 128, %s2, [#allocation5], 64, 64, 4
    $region29: #{tpu_custom_call.1} parent=1 // pred_fallthru
      _
    // Predicated region
    $region30: #{tpu_custom_call.1} parent=1 // pred_check
      _
    $region31: #{tpu_custom_call.1} parent=1 // pred_check_branch
      %194 = sbr.rel (0) target = $region33
    $region32: #{tpu_custom_call.1} parent=1 // pred_region
      %195 = dma.done [#allocation5], 128
    $region33: #{tpu_custom_call.1} parent=1 // pred_fallthru
      _
    %196 = vsyncpa [#allocation4], 1
    %197 = vsyncpa [#allocation7], 1
    %198 = vsyncpa [#allocation5], 1

</llo_original>
